<compile_context>
chip_gen: v7x
topology: tpu7x:2x2x1
jax: 0.10.0
libtpu: 0.0.40
codegen_flags: <defaults>
</compile_context>

<pallas_src>
import functools

import jax
import jax.numpy as jnp
from jax import lax
from jax.experimental import pallas as pl
from jax.experimental.pallas import tpu as pltpu


# ---------------------------------------------------------------------------
# Phase 1: streaming time reductions (memory-bound).
# ---------------------------------------------------------------------------

def _audio_sum_kernel(ah_ref, asum_ref, *, t_total, t_tile):
    """Accumulate the sum over time of one (bt, t_tile, Ha) block."""
    k = pl.program_id(1)

    @pl.when(k == 0)
    def _():
        asum_ref[...] = jnp.zeros_like(asum_ref)

    def _plain():
        asum_ref[...] += jnp.sum(ah_ref[...].astype(jnp.float32), axis=1)

    if t_total % t_tile == 0:
        _plain()
    else:
        # Ragged final time tile: the out-of-bounds tail of the block holds
        # unspecified data; select (not multiply) so garbage/NaN cannot poison
        # the f32 accumulator.  Only the last tile pays the extra VPU work.
        last = pl.num_programs(1) - 1

        @pl.when(k != last)
        def _():
            _plain()

        @pl.when(k == last)
        def _():
            x = ah_ref[...].astype(jnp.float32)          # (bt, t_tile, Ha)
            tid = k * t_tile + lax.broadcasted_iota(jnp.int32, (1, t_tile, 1), 1)
            asum_ref[...] += jnp.sum(jnp.where(tid < t_total, x, 0.0), axis=1)


def _text_sum_kernel(th_ref, m_ref, tsum_ref, cnt_ref, *, t_total, t_tile):
    """Accumulate the mask-weighted sum over time and the mask counts."""
    k = pl.program_id(1)

    @pl.when(k == 0)
    def _():
        tsum_ref[...] = jnp.zeros_like(tsum_ref)
        cnt_ref[...] = jnp.zeros_like(cnt_ref)

    def _accumulate(mask_tail):
        th = th_ref[...].astype(jnp.float32)              # (bt, t_tile, E)
        m = m_ref[...].astype(jnp.float32)                # (bt, t_tile, 1)
        prod = th * m
        if mask_tail:
            tid = k * t_tile + lax.broadcasted_iota(jnp.int32, (1, t_tile, 1), 1)
            valid = tid < t_total
            prod = jnp.where(valid, prod, 0.0)            # select, not multiply
            m = jnp.where(valid, m, 0.0)
        tsum_ref[...] += jnp.sum(prod, axis=1)
        cnt_ref[...] += jnp.sum(m, axis=1)

    if t_total % t_tile == 0:
        _accumulate(False)
    else:
        last = pl.num_programs(1) - 1

        @pl.when(k != last)
        def _():
            _accumulate(False)

        @pl.when(k == last)
        def _():
            _accumulate(True)


# ---------------------------------------------------------------------------
# Phase 2: epilogue — head matmul, pooling finalize, normalize, sim, loss.
# ---------------------------------------------------------------------------

def _head_kernel(asum_ref, w_ref, b_ref, tsum_ref, cnt_ref, temp_ref,
                 logits_ref, loss_ref, *, inv_ta):
    # Audio branch: mean over time commuted with the affine head:
    #   mean_t(x @ W + b) == mean_t(x) @ W + b   (exact identity)
    audio_emb = lax.dot_general(
        asum_ref[...] * inv_ta, w_ref[...].astype(jnp.float32),
        (((1,), (0,)), ((), ())),
        preferred_element_type=jnp.float32) + b_ref[...].astype(jnp.float32)

    # Text branch: masked-mean finalize (clamp matches torch .clamp(min=1e-9));
    # mask counts were accumulated in phase 1b, no (B, Tt) mask re-read here.
    sum_mask = jnp.maximum(cnt_ref[...], 1e-9)                # (B, 1)
    text_emb = tsum_ref[...] / sum_mask

    # L2 normalize == torch F.normalize(p=2, dim=1, eps=1e-12); rsqrt -> EUP.
    a_sq = jnp.sum(audio_emb * audio_emb, axis=1, keepdims=True)
    t_sq = jnp.sum(text_emb * text_emb, axis=1, keepdims=True)
    a_n = audio_emb * lax.rsqrt(jnp.maximum(a_sq, 1e-24))
    t_n = text_emb * lax.rsqrt(jnp.maximum(t_sq, 1e-24))

    # Similarity matrix / temperature; contract on the trailing dims of both
    # operands so no explicit transpose of t_n is materialized.
    inv_temp = 1.0 / temp_ref[0, 0]
    sim = lax.dot_general(a_n, t_n, (((1,), (1,)), ((), ())),
                          preferred_element_type=jnp.float32) * inv_temp
    logits_ref[...] = sim

    # Symmetric cross-entropy with labels = arange(B).  diag taken as the
    # rowwise a_n . t_n product (no eye-mask build / (B,B) mask-multiply).
    diag = jnp.sum(a_n * t_n, axis=1) * inv_temp
    m_r = jnp.max(sim, axis=1)
    lse_r = m_r + jnp.log(jnp.sum(jnp.exp(sim - m_r[:, None]), axis=1))
    m_c = jnp.max(sim, axis=0)
    lse_c = m_c + jnp.log(jnp.sum(jnp.exp(sim - m_c[None, :]), axis=0))
    loss = 0.5 * (jnp.mean(lse_r - diag) + jnp.mean(lse_c - diag))
    loss_ref[...] = jnp.broadcast_to(loss, (1, 1))


# ---------------------------------------------------------------------------
# Planning helpers.
# ---------------------------------------------------------------------------

def _round_up(x, m):
    return ((x + m - 1) // m) * m


def _plan_time_tile(t_total, row_bytes, target_bytes):
    """Pick a time tile for the streaming phase.

    Returns either the full axis (when it already fits the per-buffer budget,
    or is tiny) or a multiple-of-8 tile <= budget; when the tile does not
    divide t_total the kernels mask the ragged final tile, so no full-axis
    VMEM-blowing fallback and no padded HBM copy is ever needed.
    """
    if t_total <= 8 or t_total * row_bytes <= target_bytes:
        return t_total
    cap = max(8, (target_bytes // max(row_bytes, 1)) // 8 * 8)
    cap = min(cap, max(8, (t_total // 8) * 8))
    n_tiles = -(-t_total // cap)
    tile = min(cap, _round_up(-(-t_total // n_tiles), 8))
    return tile


def _stream_defaults(vmem_tile_bytes):
    """Per-buffer streaming budget and explicit scoped-VMEM limit, per chip.

    v5e/v6e: 128 MiB physical VMEM (but only 16/32 MiB scoped defaults) ->
    16 MiB tiles with a raised limit.  v7x: 64 MiB physical -> 8 MiB tiles.
    """
    try:
        cap = int(getattr(pltpu.get_tpu_info(), "vmem_capacity_bytes", 0)) or (64 << 20)
    except Exception:  # pragma: no cover - conservative fallback off-TPU
        cap = 64 << 20
    tile = (16 << 20) if cap >= (96 << 20) else (8 << 20)
    if vmem_tile_bytes is not None:
        tile = int(vmem_tile_bytes)
    # Double-buffered main stream per input + headroom for side streams,
    # outputs and internal scratch, capped well under physical VMEM.
    limit = min(cap - (16 << 20), max(32 << 20, 4 * tile + (8 << 20)))
    return tile, limit


# ---------------------------------------------------------------------------
# Wrapper.
# ---------------------------------------------------------------------------

def audio_text_model(audio_hidden, w_head, b_head, text_hidden, attn_mask,
                     temperature, *, vmem_tile_bytes=None):
    """Contrastive head. Returns (loss [1,1], logits [B,B]).

    Pass the backbone `last_hidden_state` tensors in bf16 when possible: phase
    1 is pure HBM streaming and bf16 on the wire halves its wall time; the
    kernels accumulate in f32 regardless.  `vmem_tile_bytes=None` picks a
    per-generation per-buffer budget (16 MiB on v5e/v6e, 8 MiB on v7x) and
    sets vmem_limit_bytes explicitly so v5e's 16 MiB scoped default never
    gates the block size.
    """
    B, Ta, Ha = audio_hidden.shape
    _, Tt, E = text_hidden.shape

    tile_budget, vmem_limit = _stream_defaults(vmem_tile_bytes)

    # Batch tile: bt must be a multiple of 8 (sublane rule on the (bt, feat)
    # output blocks) or equal B.  With B a multiple of 8 and B >= 16 this
    # yields >= 2 batch tiles, so the "parallel" axis can split across v7x's
    # two TensorCores; with B == 8 or B not a multiple of 8 the batch axis
    # collapses to one tile (correct, just single-core streaming on v7x).
    bt = 8 if (B % 8 == 0) else B

    ta_tile = _plan_time_tile(Ta, bt * Ha * audio_hidden.dtype.itemsize,
                              tile_budget)
    tt_tile = _plan_time_tile(Tt, bt * E * text_hidden.dtype.itemsize,
                              tile_budget)

    stream_params = pltpu.CompilerParams(
        dimension_semantics=("parallel", "arbitrary"),
        vmem_limit_bytes=vmem_limit)

    # Phase 1a: audio time-sum (streams audio_hidden exactly once, native
    # dtype on the wire, f32 accumulation in the resident output block).
    audio_sum = pl.pallas_call(
        functools.partial(_audio_sum_kernel, t_total=Ta, t_tile=ta_tile),
        out_shape=jax.ShapeDtypeStruct((B, Ha), jnp.float32),
        grid=(B // bt, pl.cdiv(Ta, ta_tile)),
        in_specs=[pl.BlockSpec((bt, ta_tile, Ha), lambda i, k: (i, k, 0))],
        out_specs=pl.BlockSpec((bt, Ha), lambda i, k: (i, 0)),
        compiler_params=stream_params,
        cost_estimate=pl.CostEstimate(
            flops=B * Ta * Ha, transcendentals=0,
            bytes_accessed=audio_hidden.size * audio_hidden.dtype.itemsize
            + B * Ha * 4),
    )(audio_hidden)

    # Phase 1b: masked text time-sum plus mask counts.  Mask is carried as a
    # narrow (B, Tt, 1) side stream (0/1 is exact in bf16) so its time axis
    # tiles with a legal (mult-of-8, full) block shape at 2 bytes/element.
    mask = attn_mask
    if mask.dtype.itemsize > 2:
        mask = mask.astype(jnp.bfloat16)
    mask3 = mask.reshape(B, Tt, 1)
    text_sum, mask_cnt = pl.pallas_call(
        functools.partial(_text_sum_kernel, t_total=Tt, t_tile=tt_tile),
        out_shape=(jax.ShapeDtypeStruct((B, E), jnp.float32),
                   jax.ShapeDtypeStruct((B, 1), jnp.float32)),
        grid=(B // bt, pl.cdiv(Tt, tt_tile)),
        in_specs=[pl.BlockSpec((bt, tt_tile, E), lambda i, k: (i, k, 0)),
                  pl.BlockSpec((bt, tt_tile, 1), lambda i, k: (i, k, 0))],
        out_specs=(pl.BlockSpec((bt, E), lambda i, k: (i, 0)),
                   pl.BlockSpec((bt, 1), lambda i, k: (i, 0))),
        compiler_params=stream_params,
        cost_estimate=pl.CostEstimate(
            flops=3 * B * Tt * E, transcendentals=0,
            bytes_accessed=text_hidden.size * text_hidden.dtype.itemsize
            + mask3.size * mask3.dtype.itemsize + B * (E + 1) * 4),
    )(text_hidden, mask3)

    # Phase 2: tiny epilogue; all operands fit whole in VMEM at any realistic
    # batch size (B x Ha, Ha x E, B x E, B x 1, B x B).
    temp = jnp.asarray(temperature, jnp.float32).reshape(1, 1)
    b2d = b_head.reshape(1, E)
    vmem = pl.BlockSpec(memory_space=pltpu.MemorySpace.VMEM)
    smem = pl.BlockSpec(memory_space=pltpu.MemorySpace.SMEM)
    logits, loss = pl.pallas_call(
        functools.partial(_head_kernel, inv_ta=1.0 / Ta),
        out_shape=(jax.ShapeDtypeStruct((B, B), jnp.float32),
                   jax.ShapeDtypeStruct((1, 1), jnp.float32)),
        in_specs=[vmem, vmem, vmem, vmem, vmem, smem],
        out_specs=(vmem, vmem),
        compiler_params=pltpu.CompilerParams(vmem_limit_bytes=vmem_limit),
    )(audio_sum, w_head, b2d, text_sum, mask_cnt, temp)
    return loss, logits


# ---------------------------------------------------------------------------
# Pure-JAX reference (faithful to the PyTorch op order: per-token linear head
# then mean, to validate the mean/linear commutation in the kernel).
# ---------------------------------------------------------------------------

def _reference(audio_hidden, w_head, b_head, text_hidden, attn_mask,
               temperature):
    tok = jnp.einsum("bth,he->bte", audio_hidden, w_head) + b_head[None, None, :]
    audio_emb = tok.mean(axis=1)
    m = attn_mask.astype(jnp.float32)[:, :, None]
    text_emb = (text_hidden * m).sum(axis=1) / jnp.clip(
        attn_mask.astype(jnp.float32).sum(axis=1, keepdims=True), 1e-9)
    a_n = audio_emb / jnp.maximum(
        jnp.linalg.norm(audio_emb, axis=1, keepdims=True), 1e-12)
    t_n = text_emb / jnp.maximum(
        jnp.linalg.norm(text_emb, axis=1, keepdims=True), 1e-12)
    sim = a_n @ t_n.T / temperature
    diag = jnp.diag(sim)
    lse_r = jax.scipy.special.logsumexp(sim, axis=1)
    lse_c = jax.scipy.special.logsumexp(sim, axis=0)
    loss = 0.5 * ((lse_r - diag).mean() + (lse_c - diag).mean())
    return loss, sim


if __name__ == "__main__":
    # Small shapes consistent with the forward pass; feature dims multiples of
    # 128, time dims deliberately NOT multiples of 8 so the ragged-tail
    # masking path is exercised (real model: Ta=1500/Ha=1280 whisper-large,
    # E=768 nomic hidden).
    B, Ta, Ha, Tt, E = 16, 36, 256, 20, 128

    key = jax.random.PRNGKey(0)
    k1, k2, k3, k4 = jax.random.split(key, 4)

    audio_hidden = jax.random.normal(k1, (B, Ta, Ha), jnp.float32)
    text_hidden = jax.random.normal(k2, (B, Tt, E), jnp.float32)
    # embedding_head: torch Linear(Ha -> E); weight stored pre-transposed [Ha, E].
    w_head = 0.02 * jax.random.normal(k3, (Ha, E), jnp.float32)
    b_head = 0.01 * jax.random.normal(k4, (E,), jnp.float32)
    temperature = jnp.float32(0.07)

    # Ragged attention mask (valid lengths per batch element).
    lengths = (4 + (jnp.arange(B) * 3) % (Tt - 3)).astype(jnp.int32)
    attn_mask = (jnp.arange(Tt)[None, :] < lengths[:, None]).astype(jnp.float32)

    # Tiny per-buffer budget so the toy shapes still exercise the multi-tile
    # time-accumulation + ragged-tail path; production uses the per-chip
    # defaults (8-16 MiB).
    loss, logits = audio_text_model(audio_hidden, w_head, b_head, text_hidden,
                                    attn_mask, temperature,
                                    vmem_tile_bytes=4 * 1024)
    jax.block_until_ready((loss, logits))

    ref_loss, ref_logits = _reference(audio_hidden, w_head, b_head,
                                      text_hidden, attn_mask, temperature)
    assert jnp.allclose(logits, ref_logits, atol=1e-4, rtol=1e-4)
    assert jnp.allclose(loss[0, 0], ref_loss, atol=1e-4, rtol=1e-4)

    print("KERNEL_OK")
</pallas_src>

<mosaic_0001>
module attributes {stable_mosaic.version = 11 : i64} {
  func.func @_audio_sum_kernel(%arg0: i32, %arg1: i32, %arg2: memref<8x8x256xf32, #tpu.memory_space<vmem>>, %arg3: memref<8x256xf32, #tpu.memory_space<vmem>>) attributes {dimension_semantics = [#tpu.dimension_semantics<parallel>, #tpu.dimension_semantics<arbitrary>], iteration_bounds = array<i64: 2, 5>, scalar_prefetch = 0 : i64, scratch_operands = 0 : i64, tpu.core_type = #tpu.core_type<tc>, window_params = [{transform_indices = @transform_0, window_bounds = array<i64: 8, 8, 256>}, {transform_indices = @transform_1, window_bounds = array<i64: 8, 256>}]} {
    %c0_i32 = arith.constant 0 : i32
    %0 = arith.cmpi eq, %arg1, %c0_i32 : i32
    %1 = arith.extui %0 : i1 to i32
    %c0_i32_0 = arith.constant 0 : i32
    %2 = arith.cmpi ne, %1, %c0_i32_0 : i32
    scf.if %2 {
      %cst = arith.constant 0.000000e+00 : f32
      %9 = vector.broadcast %cst : f32 to vector<8x256xf32>
      %c0 = arith.constant 0 : index
      %c0_4 = arith.constant 0 : index
      %10 = vector.load %arg3[%c0, %c0_4] : memref<8x256xf32, #tpu.memory_space<vmem>>, vector<8x256xf32>
      tpu.vector_store %arg3[%c0, %c0_4], %9 {strides = array<i32>} : memref<8x256xf32, #tpu.memory_space<vmem>>, vector<8x256xf32>,
    } else {
    }
    %c4_i32 = arith.constant 4 : i32
    %3 = arith.cmpi ne, %arg1, %c4_i32 : i32
    %4 = arith.extui %3 : i1 to i32
    %c0_i32_1 = arith.constant 0 : i32
    %5 = arith.cmpi ne, %4, %c0_i32_1 : i32
    scf.if %5 {
      %c0 = arith.constant 0 : index
      %c0_4 = arith.constant 0 : index
      %9 = vector.load %arg3[%c0, %c0_4] : memref<8x256xf32, #tpu.memory_space<vmem>>, vector<8x256xf32>
      %c0_5 = arith.constant 0 : index
      %c0_6 = arith.constant 0 : index
      %c0_7 = arith.constant 0 : index
      %10 = vector.load %arg2[%c0_5, %c0_6, %c0_7] : memref<8x8x256xf32, #tpu.memory_space<vmem>>, vector<8x8x256xf32>
      %cst = arith.constant dense<0.000000e+00> : vector<8x256xf32>
      %11 = vector.multi_reduction <add>, %10, %cst [1] : vector<8x8x256xf32> to vector<8x256xf32>
      %12 = arith.addf %9, %11 : vector<8x256xf32>
      %c0_8 = arith.constant 0 : index
      %c0_9 = arith.constant 0 : index
      %13 = vector.load %arg3[%c0_8, %c0_9] : memref<8x256xf32, #tpu.memory_space<vmem>>, vector<8x256xf32>
      tpu.vector_store %arg3[%c0_8, %c0_9], %12 {strides = array<i32>} : memref<8x256xf32, #tpu.memory_space<vmem>>, vector<8x256xf32>,
    } else {
    }
    %c4_i32_2 = arith.constant 4 : i32
    %6 = arith.cmpi eq, %arg1, %c4_i32_2 : i32
    %7 = arith.extui %6 : i1 to i32
    %c0_i32_3 = arith.constant 0 : i32
    %8 = arith.cmpi ne, %7, %c0_i32_3 : i32
    scf.if %8 {
      %c0 = arith.constant 0 : index
      %c0_4 = arith.constant 0 : index
      %c0_5 = arith.constant 0 : index
      %9 = vector.load %arg2[%c0, %c0_4, %c0_5] : memref<8x8x256xf32, #tpu.memory_space<vmem>>, vector<8x8x256xf32>
      %c8_i32 = arith.constant 8 : i32
      %10 = arith.muli %arg1, %c8_i32 : i32
      %11 = tpu.iota {dimensions = array<i32: 1>} : vector<1x8x1xi32>
      %12 = vector.broadcast %10 : i32 to vector<1x8x1xi32>
      %13 = arith.addi %12, %11 : vector<1x8x1xi32>
      %c0_6 = arith.constant 0 : index
      %c0_7 = arith.constant 0 : index
      %14 = vector.load %arg3[%c0_6, %c0_7] : memref<8x256xf32, #tpu.memory_space<vmem>>, vector<8x256xf32>
      %c36_i32 = arith.constant 36 : i32
      %15 = vector.broadcast %c36_i32 : i32 to vector<1x8x1xi32>
      %16 = arith.cmpi slt, %13, %15 : vector<1x8x1xi32>
      %cst = arith.constant 0.000000e+00 : f32
      %17 = vector.shape_cast %16 : vector<1x8x1xi1> to vector<1x8x1xi1>
      %18 = vector.broadcast %17 : vector<1x8x1xi1> to vector<8x8x256xi1>
      %19 = vector.broadcast %cst : f32 to vector<8x8x256xf32>
      %20 = arith.select %18, %9, %19 : vector<8x8x256xi1>, vector<8x8x256xf32>
      %cst_8 = arith.constant dense<0.000000e+00> : vector<8x256xf32>
      %21 = vector.multi_reduction <add>, %20, %cst_8 [1] : vector<8x8x256xf32> to vector<8x256xf32>
      %22 = arith.addf %14, %21 : vector<8x256xf32>
      %c0_9 = arith.constant 0 : index
      %c0_10 = arith.constant 0 : index
      %23 = vector.load %arg3[%c0_9, %c0_10] : memref<8x256xf32, #tpu.memory_space<vmem>>, vector<8x256xf32>
      tpu.vector_store %arg3[%c0_9, %c0_10], %22 {strides = array<i32>} : memref<8x256xf32, #tpu.memory_space<vmem>>, vector<8x256xf32>,
    } else {
    }
    return
  }
  func.func @transform_0(%arg0: i32, %arg1: i32) -> (i32, i32, i32) {
    %c0_i32 = arith.constant 0 : i32
    %c0_i32_0 = arith.constant 0 : i32
    return %arg0, %arg1, %c0_i32 : i32, i32, i32
  }
  func.func @transform_1(%arg0: i32, %arg1: i32) -> (i32, i32) {
    %c0_i32 = arith.constant 0 : i32
    %c0_i32_0 = arith.constant 0 : i32
    return %arg0, %c0_i32 : i32, i32
  }
}

</mosaic_0001>

<llo_original>
// kernel: tpu_custom_call.1
$region0: #{tpu_custom_call.1}
  #allocation0 [shape = 'u32[]', space=smem, size = 0x4, offset = 0x4, fixed_abs, tag = 'smem constant byte address 0x4 - core index']
  #allocation1 [shape = 'u32[144,128]{1,0:T(1,128)}', space=vmem, size = 0x12000, scoped, tag = 'internal scratch']
  %s0 = inlined_call_operand.vmem [shape: f32[16,36,256], index: 0, kind: input, shape index: {}]
  %s1 = inlined_call_operand.hbm [shape: f32[16,256], index: 1, kind: output, shape index: {}]
  %s2 = sld [smem:[#allocation0]]
  $region72: #{tpu_custom_call.1} parent=0
    _
  %s4 = ssub.s32 1, %s2
  %s5 = scalar_select 0, %s4, %s2
  $region1: #{tpu_custom_call.1} parent=0
    #allocation2 [shape = 'u8[131072]{0}', space=vmem, size = 0x20000, scoped, tag = 'input window, operand 0']
    #allocation3 [shape = 'u8[16384]{0}', space=vmem, size = 0x4000, scoped, tag = 'output window, operand 0']
    #allocation4 [shape = 's32[2]{0}', space=sflag, size = 0x8, scoped, tag = 'scoped memory for tpu_custom_call.1']
    %6 = vsyncpa [#allocation4], 0
    %s7 = scalar_lea.sflag [#allocation4], 1
    %8 = vsyncpa %s7, 0
    loop: start=0, step=1, limit=12
    $region2: #{tpu_custom_call.1} parent=1 // loop_pre_header
      _
    $region3: #{tpu_custom_call.1} parent=1 // loop_header
      %s10 = sphi 0, %s14
      %p11 = scmp.ge.s32.totalorder %s10, 12
      %s17 = sphi 0, %s29
      %s18 = sphi 0, %s25
      %s19 = sphi 0, %s17
      %s20 = sphi 0, %s18
      %s21 = sphi 0, %s19
      %s22 = sphi 0, %s20
      %s34 = sphi 0, %s36
      %s37 = sphi 0, %s34
      %s38 = sphi 0, %s37
      %s54 = sphi 0, %s38
      %s60 = sphi 0, %s62
      %s63 = sphi 0, %s60
      %s64 = sphi 0, %s63
      %s80 = sphi 0, %s64
    $region4: #{tpu_custom_call.1} parent=1 // loop_header_branch
      %13 = sbr.rel (%p11) target = $region8
    $region5: #{tpu_custom_call.1} parent=1 // loop_body
      %s15 = ssub.s32 %s10, 1
      %s16 = ssub.s32 %s10, 2
      %s23 = sadd.s32 1, %s18
      %p24 = scmp.ge.s32.totalorder %s23, 5
      %s25 = scalar_select %p24, 0, %s23
      %s26 = sadd.s32 1, %s17
      %s27 = scalar_select %p24, %s26, %s17
      %p28 = scmp.ge.s32.totalorder %s27, 2
      %s29 = scalar_select %p28, 0, %s27
      %s30 = ssub.s32 %s17, %s29
      %s31 = ssub.s32 %s18, %s25
      %s32 = sor.u32 %s30, %s31
      %p33 = scmp.eq.s32.totalorder %s32, 0
      %s35 = sadd.s32 %s34, 1
      %s36 = scalar_select %p33, %s34, %s35
      %p39 = pneg %p33
      %p40 = scmp.eq.s32.totalorder %s10, 9
      %p41 = por %p39, %p40
      %p42 = scmp.ne.s32.totalorder %s34, %s37
      %p43 = scmp.eq.s32.totalorder %s10, 0
      %p44 = por %p42, %p43
      %p45 = scmp.ne.s32.totalorder %s34, %s37
      %p46 = scmp.eq.s32.totalorder %s15, 9
      %p47 = por %p45, %p46
      %p48 = scmp.ne.s32.totalorder %s37, %s38
      %p49 = scmp.eq.s32.totalorder %s15, 0
      %p50 = por %p48, %p49
      %p51 = scmp.ne.s32.totalorder %s37, %s38
      %p52 = scmp.eq.s32.totalorder %s16, 9
      %p53 = por %p51, %p52
      %p55 = scmp.ne.s32.totalorder %s38, %s54
      %p56 = scmp.eq.s32.totalorder %s16, 0
      %p57 = por %p55, %p56
      %s58 = ssub.s32 %s17, %s29
      %p59 = scmp.eq.s32.totalorder %s58, 0
      %s61 = sadd.s32 %s60, 1
      %s62 = scalar_select %p59, %s60, %s61
      %p65 = pneg %p59
      %p66 = scmp.eq.s32.totalorder %s10, 9
      %p67 = por %p65, %p66
      %p68 = scmp.ne.s32.totalorder %s60, %s63
      %p69 = scmp.eq.s32.totalorder %s10, 0
      %p70 = por %p68, %p69
      %p71 = scmp.ne.s32.totalorder %s60, %s63
      %p72 = scmp.eq.s32.totalorder %s15, 9
      %p73 = por %p71, %p72
      %p74 = scmp.ne.s32.totalorder %s63, %s64
      %p75 = scmp.eq.s32.totalorder %s15, 0
      %p76 = por %p74, %p75
      %p77 = scmp.ne.s32.totalorder %s63, %s64
      %p78 = scmp.eq.s32.totalorder %s16, 9
      %p79 = por %p77, %p78
      %p81 = scmp.ne.s32.totalorder %s64, %s80
      %p82 = scmp.eq.s32.totalorder %s16, 0
      %p83 = por %p81, %p82
      %p84 = scmp.le.s32.totalorder 1, %s10
      %p85 = scmp.lt.s32.totalorder %s10, 11
      %p86 = pnand %p84, %p85
      %p87 = pneg %p86
      // Predicated region
      $region9: #{tpu_custom_call.1} parent=5 // pred_check
        _
      $region10: #{tpu_custom_call.1} parent=5 // pred_check_branch
        %89 = sbr.rel (%p86) target = $region12
      $region11: #{tpu_custom_call.1} parent=5 // pred_region
        %s90 = ssub.s32 %s10, 1
      $region12: #{tpu_custom_call.1} parent=5 // pred_fallthru
        _
      %p91 = scmp.lt.s32.totalorder %s10, 10
      // Predicated region
      $region13: #{tpu_custom_call.1} parent=5 // pred_check
        %p92 = pneg %p91
      $region14: #{tpu_custom_call.1} parent=5 // pred_check_branch
        %94 = sbr.rel (%p92) target = $region16
      $region15: #{tpu_custom_call.1} parent=5 // pred_region
        // Predicated region
        $region17: #{tpu_custom_call.1} parent=15 // pred_check
          %p95 = pneg %p44
        $region18: #{tpu_custom_call.1} parent=15 // pred_check_branch
          %97 = sbr.rel (%p95) target = $region20
        $region19: #{tpu_custom_call.1} parent=15 // pred_region
          %s98 = sand.u32 %s34, 1
          %s99 = sand.u32 %s34, 1
          %s100 = smul.addr %s99, 128
          %s101 = scalar_lea.vmem [#allocation2], %s100
          %s102 = smul.u32 8, %s17
          %s103 = smul.addr %s18, 2
          %s104 = smul.addr %s102, 10
          %s105 = sadd.s32 %s103, %s104
          %s106 = smul.addr %s105, 8
          %s107 = scalar_lea.vmem %s0, %s106
          // Predicated region
          $region21: #{tpu_custom_call.1} parent=19 // pred_check
            _
          $region22: #{tpu_custom_call.1} parent=19 // pred_check_branch
            %109 = sbr.rel (0) target = $region24
          $region23: #{tpu_custom_call.1} parent=19 // pred_region
            // Predicated region
            $region25: #{tpu_custom_call.1} parent=23 // pred_check
              _
            $region26: #{tpu_custom_call.1} parent=23 // pred_check_branch
              %111 = sbr.rel (0) target = $region28
            $region27: #{tpu_custom_call.1} parent=23 // pred_region
              loop: start=0, step=1, limit=1
              $region29: #{tpu_custom_call.1} parent=27 // loop_pre_header
                _
              $region30: #{tpu_custom_call.1} parent=27 // loop_header
                %s113 = sphi 0, %s117
                %p114 = scmp.ge.s32.totalorder %s113, 1
                %s118 = sphi %s107, %s107
                %s119 = sphi %s101, %s101
              $region31: #{tpu_custom_call.1} parent=27 // loop_header_branch
                %116 = sbr.rel (%p114) target = $region35
              $region32: #{tpu_custom_call.1} parent=27 // loop_body
                %v120 = vld [vmem:[%s118] sm:$0xff]
                %121 = vst [vmem:[%s119] sm:$0xff] %v120
                %v122 = vld [vmem:[%s118 + $0x8] sm:$0xff]
                %123 = vst [vmem:[%s119 + $0x8] sm:$0xff] %v122
                %v124 = vld [vmem:[%s118 + $0x50] sm:$0xff]
                %125 = vst [vmem:[%s119 + $0x10] sm:$0xff] %v124
                %v126 = vld [vmem:[%s118 + $0x58] sm:$0xff]
                %127 = vst [vmem:[%s119 + $0x18] sm:$0xff] %v126
                %v128 = vld [vmem:[%s118 + $0xa0] sm:$0xff]
                %129 = vst [vmem:[%s119 + $0x20] sm:$0xff] %v128
                %v130 = vld [vmem:[%s118 + $0xa8] sm:$0xff]
                %131 = vst [vmem:[%s119 + $0x28] sm:$0xff] %v130
                %v132 = vld [vmem:[%s118 + $0xf0] sm:$0xff]
                %133 = vst [vmem:[%s119 + $0x30] sm:$0xff] %v132
                %v134 = vld [vmem:[%s118 + $0xf8] sm:$0xff]
                %135 = vst [vmem:[%s119 + $0x38] sm:$0xff] %v134
                %v136 = vld [vmem:[%s118 + $0x140] sm:$0xff]
                %137 = vst [vmem:[%s119 + $0x40] sm:$0xff] %v136
                %v138 = vld [vmem:[%s118 + $0x148] sm:$0xff]
                %139 = vst [vmem:[%s119 + $0x48] sm:$0xff] %v138
                %v140 = vld [vmem:[%s118 + $0x190] sm:$0xff]
                %141 = vst [vmem:[%s119 + $0x50] sm:$0xff] %v140
                %v142 = vld [vmem:[%s118 + $0x198] sm:$0xff]
                %143 = vst [vmem:[%s119 + $0x58] sm:$0xff] %v142
                %v144 = vld [vmem:[%s118 + $0x1e0] sm:$0xff]
                %145 = vst [vmem:[%s119 + $0x60] sm:$0xff] %v144
                %v146 = vld [vmem:[%s118 + $0x1e8] sm:$0xff]
                %147 = vst [vmem:[%s119 + $0x68] sm:$0xff] %v146
                %v148 = vld [vmem:[%s118 + $0x230] sm:$0xff]
                %149 = vst [vmem:[%s119 + $0x70] sm:$0xff] %v148
                %v150 = vld [vmem:[%s118 + $0x238] sm:$0xff]
                %151 = vst [vmem:[%s119 + $0x78] sm:$0xff] %v150
              $region33: #{tpu_custom_call.1} parent=27 // loop_footer
                %s117 = sadd.s32 1, %s113
              $region34: #{tpu_custom_call.1} parent=27 // loop_footer_branch
                %112 = sbr.rel target = $region30
              $region35: #{tpu_custom_call.1} parent=27 // loop_exit
                _
            $region28: #{tpu_custom_call.1} parent=23 // pred_fallthru
              _
            // Predicated region
            $region36: #{tpu_custom_call.1} parent=23 // pred_check
              _
            $region37: #{tpu_custom_call.1} parent=23 // pred_check_branch
              %153 = sbr.rel target = $region39
            $region38: #{tpu_custom_call.1} parent=23 // pred_region
              _
            $region39: #{tpu_custom_call.1} parent=23 // pred_fallthru
              _
          $region24: #{tpu_custom_call.1} parent=19 // pred_fallthru
            _
          %154 = vnop
        $region20: #{tpu_custom_call.1} parent=15 // pred_fallthru
          _
      $region16: #{tpu_custom_call.1} parent=5 // pred_fallthru
        _
      %p155 = scmp.le.s32.totalorder 1, %s10
      %p156 = scmp.lt.s32.totalorder %s10, 11
      %p157 = pnand %p155, %p156
      %p158 = pneg %p157
      // Predicated region
      $region40: #{tpu_custom_call.1} parent=5 // pred_check
        _
      $region41: #{tpu_custom_call.1} parent=5 // pred_check_branch
        %160 = sbr.rel (%p157) target = $region43
      $region42: #{tpu_custom_call.1} parent=5 // pred_region
        %s161 = ssub.s32 %s10, 1
        %s162 = sand.u32 %s37, 1
        %s163 = sand.u32 %s37, 1
        %s164 = smul.addr %s163, 128
        %s165 = scalar_lea.vmem [#allocation2], %s164
        // Predicated region
        $region44: #{tpu_custom_call.1} parent=42 // pred_check
          %p166 = pneg %p50
        $region45: #{tpu_custom_call.1} parent=42 // pred_check_branch
          %168 = sbr.rel (%p166) target = $region47
        $region46: #{tpu_custom_call.1} parent=42 // pred_region
          _
        $region47: #{tpu_custom_call.1} parent=42 // pred_fallthru
          _
        %s169 = sand.u32 %s37, 1
        %s170 = sand.u32 %s37, 1
        %s171 = smul.addr %s170, 128
        %s172 = scalar_lea.vmem [#allocation2], %s171
        %p173 = pneg %p50
        %p174 = pneg %p47
        %p175 = pneg %p76
        %p176 = pneg %p73
        %s177 = sand.u32 %s63, 1
        %s178 = scalar_lea.sflag [#allocation4], %s177
        %s179 = sand.u32 %s63, 1
        %s180 = smul.addr %s179, 16
        %s181 = scalar_lea.vmem [#allocation3], %s180
        %s182 = smul.u32 8, %s19
        %p183 = scmp.eq.s32.totalorder %s20, 0
        // Predicated region
        $region48: #{tpu_custom_call.1} parent=42 // pred_check
          %p184 = pneg %p183
        $region49: #{tpu_custom_call.1} parent=42 // pred_check_branch
          %186 = sbr.rel (%p184) target = $region51
        $region50: #{tpu_custom_call.1} parent=42 // pred_region
          %187 = vst [vmem:[%s181] sm:$0xff] 0.0
          %188 = vst [vmem:[%s181 + $0x8] sm:$0xff] 0.0
        $region51: #{tpu_custom_call.1} parent=42 // pred_fallthru
          _
        %p189 = scmp.ne.s32.totalorder %s20, 4
        // Predicated region
        $region52: #{tpu_custom_call.1} parent=42 // pred_check
          %p190 = pneg %p189
        $region53: #{tpu_custom_call.1} parent=42 // pred_check_branch
          %192 = sbr.rel (%p190) target = $region55
        $region54: #{tpu_custom_call.1} parent=42 // pred_region
          %v193 = vld [vmem:[%s181] sm:$0xff]
          %v194 = vld [vmem:[%s181 + $0x8] sm:$0xff]
          %v195 = vld [vmem:[%s165] sm:$0xff]
          %v196 = vld [vmem:[%s165 + $0x8] sm:$0xff]
          %v197 = vld [vmem:[%s165 + $0x10] sm:$0xff]
          %v198 = vld [vmem:[%s165 + $0x18] sm:$0xff]
          %v199 = vld [vmem:[%s165 + $0x20] sm:$0xff]
          %v200 = vld [vmem:[%s165 + $0x28] sm:$0xff]
          %v201 = vld [vmem:[%s165 + $0x30] sm:$0xff]
          %v202 = vld [vmem:[%s165 + $0x38] sm:$0xff]
          %v203 = vld [vmem:[%s165 + $0x40] sm:$0xff]
          %v204 = vld [vmem:[%s165 + $0x48] sm:$0xff]
          %v205 = vld [vmem:[%s165 + $0x50] sm:$0xff]
          %v206 = vld [vmem:[%s165 + $0x58] sm:$0xff]
          %v207 = vld [vmem:[%s165 + $0x60] sm:$0xff]
          %v208 = vld [vmem:[%s165 + $0x68] sm:$0xff]
          %v209 = vld [vmem:[%s165 + $0x70] sm:$0xff]
          %v210 = vld [vmem:[%s165 + $0x78] sm:$0xff]
          %v211 = vrot.slane %v195, 4
          %v212 = vadd.f32 %v195, %v211
          %v213 = vrot.slane %v212, 2
          %v214 = vadd.f32 %v212, %v213
          %v215 = vrot.slane %v214, 1
          %v216 = vadd.f32 %v214, %v215
          %v217 = vrot.slane %v196, 4
          %v218 = vadd.f32 %v196, %v217
          %v219 = vrot.slane %v218, 2
          %v220 = vadd.f32 %v218, %v219
          %v221 = vrot.slane %v220, 1
          %v222 = vadd.f32 %v220, %v221
          %v223 = vrot.slane %v197, 4
          %v224 = vadd.f32 %v197, %v223
          %v225 = vrot.slane %v224, 2
          %v226 = vadd.f32 %v224, %v225
          %v227 = vrot.slane %v226, 1
          %v228 = vadd.f32 %v226, %v227
          %v229 = vrot.slane %v198, 4
          %v230 = vadd.f32 %v198, %v229
          %v231 = vrot.slane %v230, 2
          %v232 = vadd.f32 %v230, %v231
          %v233 = vrot.slane %v232, 1
          %v234 = vadd.f32 %v232, %v233
          %v235 = vrot.slane %v199, 4
          %v236 = vadd.f32 %v199, %v235
          %v237 = vrot.slane %v236, 2
          %v238 = vadd.f32 %v236, %v237
          %v239 = vrot.slane %v238, 1
          %v240 = vadd.f32 %v238, %v239
          %v241 = vrot.slane %v200, 4
          %v242 = vadd.f32 %v200, %v241
          %v243 = vrot.slane %v242, 2
          %v244 = vadd.f32 %v242, %v243
          %v245 = vrot.slane %v244, 1
          %v246 = vadd.f32 %v244, %v245
          %v247 = vrot.slane %v201, 4
          %v248 = vadd.f32 %v201, %v247
          %v249 = vrot.slane %v248, 2
          %v250 = vadd.f32 %v248, %v249
          %v251 = vrot.slane %v250, 1
          %v252 = vadd.f32 %v250, %v251
          %v253 = vrot.slane %v202, 4
          %v254 = vadd.f32 %v202, %v253
          %v255 = vrot.slane %v254, 2
          %v256 = vadd.f32 %v254, %v255
          %v257 = vrot.slane %v256, 1
          %v258 = vadd.f32 %v256, %v257
          %v259 = vrot.slane %v203, 4
          %v260 = vadd.f32 %v203, %v259
          %v261 = vrot.slane %v260, 2
          %v262 = vadd.f32 %v260, %v261
          %v263 = vrot.slane %v262, 1
          %v264 = vadd.f32 %v262, %v263
          %v265 = vrot.slane %v204, 4
          %v266 = vadd.f32 %v204, %v265
          %v267 = vrot.slane %v266, 2
          %v268 = vadd.f32 %v266, %v267
          %v269 = vrot.slane %v268, 1
          %v270 = vadd.f32 %v268, %v269
          %v271 = vrot.slane %v205, 4
          %v272 = vadd.f32 %v205, %v271
          %v273 = vrot.slane %v272, 2
          %v274 = vadd.f32 %v272, %v273
          %v275 = vrot.slane %v274, 1
          %v276 = vadd.f32 %v274, %v275
          %v277 = vrot.slane %v206, 4
          %v278 = vadd.f32 %v206, %v277
          %v279 = vrot.slane %v278, 2
          %v280 = vadd.f32 %v278, %v279
          %v281 = vrot.slane %v280, 1
          %v282 = vadd.f32 %v280, %v281
          %v283 = vrot.slane %v207, 4
          %v284 = vadd.f32 %v207, %v283
          %v285 = vrot.slane %v284, 2
          %v286 = vadd.f32 %v284, %v285
          %v287 = vrot.slane %v286, 1
          %v288 = vadd.f32 %v286, %v287
          %v289 = vrot.slane %v208, 4
          %v290 = vadd.f32 %v208, %v289
          %v291 = vrot.slane %v290, 2
          %v292 = vadd.f32 %v290, %v291
          %v293 = vrot.slane %v292, 1
          %v294 = vadd.f32 %v292, %v293
          %v295 = vrot.slane %v209, 4
          %v296 = vadd.f32 %v209, %v295
          %v297 = vrot.slane %v296, 2
          %v298 = vadd.f32 %v296, %v297
          %v299 = vrot.slane %v298, 1
          %v300 = vadd.f32 %v298, %v299
          %v301 = vrot.slane %v210, 4
          %v302 = vadd.f32 %v210, %v301
          %v303 = vrot.slane %v302, 2
          %v304 = vadd.f32 %v302, %v303
          %v305 = vrot.slane %v304, 1
          %v306 = vadd.f32 %v304, %v305
          %vm323 = vcmask 1041409
          %v324 = vsel %vm323, %v228, %v216
          %vm325 = vcmask 1042434
          %v326 = vsel %vm325, %v240, %v324
          %vm327 = vcmask 1043459
          %v328 = vsel %vm327, %v252, %v326
          %vm329 = vcmask 1044484
          %v330 = vsel %vm329, %v264, %v328
          %vm331 = vcmask 1045509
          %v332 = vsel %vm331, %v276, %v330
          %vm333 = vcmask 1046534
          %v334 = vsel %vm333, %v288, %v332
          %vm335 = vcmask 1047559
          %v336 = vsel %vm335, %v300, %v334
          %v337 = vsel %vm323, %v234, %v222
          %v338 = vsel %vm325, %v246, %v337
          %v339 = vsel %vm327, %v258, %v338
          %v340 = vsel %vm329, %v270, %v339
          %v341 = vsel %vm331, %v282, %v340
          %v342 = vsel %vm333, %v294, %v341
          %v343 = vsel %vm335, %v306, %v342
          %v346 = vadd.f32 %v193, %v336
          %v347 = vadd.f32 %v194, %v343
          %348 = vst [vmem:[%s181] sm:$0xff] %v346
          %349 = vst [vmem:[%s181 + $0x8] sm:$0xff] %v347
        $region55: #{tpu_custom_call.1} parent=42 // pred_fallthru
          _
        %p350 = scmp.eq.s32.totalorder %s20, 4
        // Predicated region
        $region56: #{tpu_custom_call.1} parent=42 // pred_check
          %p351 = pneg %p350
        $region57: #{tpu_custom_call.1} parent=42 // pred_check_branch
          %353 = sbr.rel (%p351) target = $region59
        $region58: #{tpu_custom_call.1} parent=42 // pred_region
          %v354 = vld [vmem:[%s165] sm:$0xff]
          %v355 = vld [vmem:[%s165 + $0x8] sm:$0xff]
          %v356 = vld [vmem:[%s165 + $0x10] sm:$0xff]
          %v357 = vld [vmem:[%s165 + $0x18] sm:$0xff]
          %v358 = vld [vmem:[%s165 + $0x20] sm:$0xff]
          %v359 = vld [vmem:[%s165 + $0x28] sm:$0xff]
          %v360 = vld [vmem:[%s165 + $0x30] sm:$0xff]
          %v361 = vld [vmem:[%s165 + $0x38] sm:$0xff]
          %v362 = vld [vmem:[%s165 + $0x40] sm:$0xff]
          %v363 = vld [vmem:[%s165 + $0x48] sm:$0xff]
          %v364 = vld [vmem:[%s165 + $0x50] sm:$0xff]
          %v365 = vld [vmem:[%s165 + $0x58] sm:$0xff]
          %v366 = vld [vmem:[%s165 + $0x60] sm:$0xff]
          %v367 = vld [vmem:[%s165 + $0x68] sm:$0xff]
          %v368 = vld [vmem:[%s165 + $0x70] sm:$0xff]
          %v369 = vld [vmem:[%s165 + $0x78] sm:$0xff]
          %s370 = smul.u32 %s20, 8
          %v371 = vlaneseq
          %v372 = vshrl.u32 %v371, 7
          %v373 = vstv %s370
          %v374 = vadd.s32 %v373, %v372
          %v375 = vld [vmem:[%s181] sm:$0xff]
          %v376 = vld [vmem:[%s181 + $0x8] sm:$0xff]
          %vm377 = vcmp.lt.s32.totalorder %v374, 36
          %v378 = vsel %vm377, 1, 0
          %vm379 = vcmp.eq.s32.totalorder %v378, 1
          %v380 = vsel %vm379, %v354, 0.0
          %v381 = vsel %vm379, %v355, 0.0
          %v382 = vsel %vm379, %v356, 0.0
          %v383 = vsel %vm379, %v357, 0.0
          %v384 = vsel %vm379, %v358, 0.0
          %v385 = vsel %vm379, %v359, 0.0
          %v386 = vsel %vm379, %v360, 0.0
          %v387 = vsel %vm379, %v361, 0.0
          %v388 = vsel %vm379, %v362, 0.0
          %v389 = vsel %vm379, %v363, 0.0
          %v390 = vsel %vm379, %v364, 0.0
          %v391 = vsel %vm379, %v365, 0.0
          %v392 = vsel %vm379, %v366, 0.0
          %v393 = vsel %vm379, %v367, 0.0
          %v394 = vsel %vm379, %v368, 0.0
          %v395 = vsel %vm379, %v369, 0.0
          %v396 = vrot.slane %v380, 4
          %v397 = vadd.f32 %v380, %v396
          %v398 = vrot.slane %v397, 2
          %v399 = vadd.f32 %v397, %v398
          %v400 = vrot.slane %v399, 1
          %v401 = vadd.f32 %v399, %v400
          %v402 = vrot.slane %v381, 4
          %v403 = vadd.f32 %v381, %v402
          %v404 = vrot.slane %v403, 2
          %v405 = vadd.f32 %v403, %v404
          %v406 = vrot.slane %v405, 1
          %v407 = vadd.f32 %v405, %v406
          %v408 = vrot.slane %v382, 4
          %v409 = vadd.f32 %v382, %v408
          %v410 = vrot.slane %v409, 2
          %v411 = vadd.f32 %v409, %v410
          %v412 = vrot.slane %v411, 1
          %v413 = vadd.f32 %v411, %v412
          %v414 = vrot.slane %v383, 4
          %v415 = vadd.f32 %v383, %v414
          %v416 = vrot.slane %v415, 2
          %v417 = vadd.f32 %v415, %v416
          %v418 = vrot.slane %v417, 1
          %v419 = vadd.f32 %v417, %v418
          %v420 = vrot.slane %v384, 4
          %v421 = vadd.f32 %v384, %v420
          %v422 = vrot.slane %v421, 2
          %v423 = vadd.f32 %v421, %v422
          %v424 = vrot.slane %v423, 1
          %v425 = vadd.f32 %v423, %v424
          %v426 = vrot.slane %v385, 4
          %v427 = vadd.f32 %v385, %v426
          %v428 = vrot.slane %v427, 2
          %v429 = vadd.f32 %v427, %v428
          %v430 = vrot.slane %v429, 1
          %v431 = vadd.f32 %v429, %v430
          %v432 = vrot.slane %v386, 4
          %v433 = vadd.f32 %v386, %v432
          %v434 = vrot.slane %v433, 2
          %v435 = vadd.f32 %v433, %v434
          %v436 = vrot.slane %v435, 1
          %v437 = vadd.f32 %v435, %v436
          %v438 = vrot.slane %v387, 4
          %v439 = vadd.f32 %v387, %v438
          %v440 = vrot.slane %v439, 2
          %v441 = vadd.f32 %v439, %v440
          %v442 = vrot.slane %v441, 1
          %v443 = vadd.f32 %v441, %v442
          %v444 = vrot.slane %v388, 4
          %v445 = vadd.f32 %v388, %v444
          %v446 = vrot.slane %v445, 2
          %v447 = vadd.f32 %v445, %v446
          %v448 = vrot.slane %v447, 1
          %v449 = vadd.f32 %v447, %v448
          %v450 = vrot.slane %v389, 4
          %v451 = vadd.f32 %v389, %v450
          %v452 = vrot.slane %v451, 2
          %v453 = vadd.f32 %v451, %v452
          %v454 = vrot.slane %v453, 1
          %v455 = vadd.f32 %v453, %v454
          %v456 = vrot.slane %v390, 4
          %v457 = vadd.f32 %v390, %v456
          %v458 = vrot.slane %v457, 2
          %v459 = vadd.f32 %v457, %v458
          %v460 = vrot.slane %v459, 1
          %v461 = vadd.f32 %v459, %v460
          %v462 = vrot.slane %v391, 4
          %v463 = vadd.f32 %v391, %v462
          %v464 = vrot.slane %v463, 2
          %v465 = vadd.f32 %v463, %v464
          %v466 = vrot.slane %v465, 1
          %v467 = vadd.f32 %v465, %v466
          %v468 = vrot.slane %v392, 4
          %v469 = vadd.f32 %v392, %v468
          %v470 = vrot.slane %v469, 2
          %v471 = vadd.f32 %v469, %v470
          %v472 = vrot.slane %v471, 1
          %v473 = vadd.f32 %v471, %v472
          %v474 = vrot.slane %v393, 4
          %v475 = vadd.f32 %v393, %v474
          %v476 = vrot.slane %v475, 2
          %v477 = vadd.f32 %v475, %v476
          %v478 = vrot.slane %v477, 1
          %v479 = vadd.f32 %v477, %v478
          %v480 = vrot.slane %v394, 4
          %v481 = vadd.f32 %v394, %v480
          %v482 = vrot.slane %v481, 2
          %v483 = vadd.f32 %v481, %v482
          %v484 = vrot.slane %v483, 1
          %v485 = vadd.f32 %v483, %v484
          %v486 = vrot.slane %v395, 4
          %v487 = vadd.f32 %v395, %v486
          %v488 = vrot.slane %v487, 2
          %v489 = vadd.f32 %v487, %v488
          %v490 = vrot.slane %v489, 1
          %v491 = vadd.f32 %v489, %v490
          %vm508 = vcmask 1041409
          %v509 = vsel %vm508, %v413, %v401
          %vm510 = vcmask 1042434
          %v511 = vsel %vm510, %v425, %v509
          %vm512 = vcmask 1043459
          %v513 = vsel %vm512, %v437, %v511
          %vm514 = vcmask 1044484
          %v515 = vsel %vm514, %v449, %v513
          %vm516 = vcmask 1045509
          %v517 = vsel %vm516, %v461, %v515
          %vm518 = vcmask 1046534
          %v519 = vsel %vm518, %v473, %v517
          %vm520 = vcmask 1047559
          %v521 = vsel %vm520, %v485, %v519
          %v522 = vsel %vm508, %v419, %v407
          %v523 = vsel %vm510, %v431, %v522
          %v524 = vsel %vm512, %v443, %v523
          %v525 = vsel %vm514, %v455, %v524
          %v526 = vsel %vm516, %v467, %v525
          %v527 = vsel %vm518, %v479, %v526
          %v528 = vsel %vm520, %v491, %v527
          %v531 = vadd.f32 %v375, %v521
          %v532 = vadd.f32 %v376, %v528
          %533 = vst [vmem:[%s181] sm:$0xff] %v531
          %534 = vst [vmem:[%s181 + $0x8] sm:$0xff] %v532
        $region59: #{tpu_custom_call.1} parent=42 // pred_fallthru
          _
        %s535 = sand.u32 %s63, 1
        %s536 = scalar_lea.sflag [#allocation4], %s535
        %s537 = sand.u32 %s63, 1
        %s538 = smul.addr %s537, 16
        %s539 = scalar_lea.vmem [#allocation3], %s538
        // Predicated region
        $region60: #{tpu_custom_call.1} parent=42 // pred_check
          %p540 = pneg %p73
        $region61: #{tpu_custom_call.1} parent=42 // pred_check_branch
          %542 = sbr.rel (%p540) target = $region63
        $region62: #{tpu_custom_call.1} parent=42 // pred_region
          %s544 = ssub.s32 256, 256
          %545 = vsyncadd %s536, %s544
          %s546 = smul.addr %s19, 2
          %s547 = smul.addr %s546, 128
          %s548 = scalar_lea.hbm %s1, %s547
          %s550 = sshll.u32 %s539, 4
          %s551 = int_to_ptr.vmem [resolvable:$true] %s550
          %553 = dma.vmem_to_hbm [thread:$0]  %s551, 256, %s548, %s536
        $region63: #{tpu_custom_call.1} parent=42 // pred_fallthru
          _
      $region43: #{tpu_custom_call.1} parent=5 // pred_fallthru
        _
      %p554 = scmp.le.s32.totalorder 2, %s10
      // Predicated region
      $region64: #{tpu_custom_call.1} parent=5 // pred_check
        %p555 = pneg %p554
      $region65: #{tpu_custom_call.1} parent=5 // pred_check_branch
        %557 = sbr.rel (%p555) target = $region67
      $region66: #{tpu_custom_call.1} parent=5 // pred_region
        %s558 = ssub.s32 %s10, 2
        // Predicated region
        $region68: #{tpu_custom_call.1} parent=66 // pred_check
          %p559 = pneg %p79
        $region69: #{tpu_custom_call.1} parent=66 // pred_check_branch
          %561 = sbr.rel (%p559) target = $region71
        $region70: #{tpu_custom_call.1} parent=66 // pred_region
          %s562 = sand.u32 %s64, 1
          %s563 = scalar_lea.sflag [#allocation4], %s562
          %s564 = sand.u32 %s64, 1
          %s565 = smul.addr %s564, 16
          %s566 = scalar_lea.vmem [#allocation3], %s565
          %567 = dma.done %s563, 256
        $region71: #{tpu_custom_call.1} parent=66 // pred_fallthru
          _
      $region67: #{tpu_custom_call.1} parent=5 // pred_fallthru
        _
    $region6: #{tpu_custom_call.1} parent=1 // loop_footer
      %s14 = sadd.s32 1, %s10
    $region7: #{tpu_custom_call.1} parent=1 // loop_footer_branch
      %9 = sbr.rel target = $region3
    $region8: #{tpu_custom_call.1} parent=1 // loop_exit
      _
    %568 = vsyncpa [#allocation4], 1
    %s569 = scalar_lea.sflag [#allocation4], 1
    %570 = vsyncpa %s569, 1

</llo_original>
